<compile_context>
chip_gen: v6e
topology: v6e:2x2x1
jax: 0.10.0
libtpu: 0.0.40
codegen_flags: <defaults>
</compile_context>

<pallas_src>
import jax
import jax.numpy as jnp
from jax.experimental import pallas as pl
from jax.experimental.pallas import tpu as pltpu


_LANE = 128
_SUBLANE = 8


def _identity_kernel(x_ref, o_ref):
    # forward(x) == x : pure tile copy (output buffer is aliased to the input).
    o_ref[...] = x_ref[...]


def _pick_geometry(total, itemsize, target_block_bytes=2 * 1024 * 1024):
    """Factor `total` elements into a lane-dense 2D view plus a row-block size.

    Guarantees:
      * cols is a multiple of 128  (full-width, unmasked vst lanes),
      * rows and block_rows are multiples of 8 (fully populated 8x128 vregs),
      * one (block_rows, cols) tile <= target_block_bytes, keeping the
        double-buffered pipeline well inside scoped VMEM on v5e/v6e/v7x.

    Returns None if no such factorization exists; the caller then falls back
    to a plain identity (which is exactly the module's semantics anyway).
    """
    if total % (_LANE * _SUBLANE) != 0:
        return None

    # Prefer a wider lane dim (bigger contiguous DMA/vst bursts), capped at 4096.
    cols = _LANE
    for k in range(32, 0, -1):
        c = _LANE * k
        if total % c == 0 and (total // c) % _SUBLANE == 0:
            cols = c
            break
    rows = total // cols

    # Largest multiple-of-8 divisor of `rows` whose tile fits the byte budget.
    row_bytes = cols * itemsize
    max_rows = max(_SUBLANE, min(rows, target_block_bytes // row_bytes))
    block_rows = _SUBLANE
    r = _SUBLANE
    while r <= max_rows:
        if rows % r == 0:
            block_rows = r
        r += _SUBLANE
    return rows, cols, block_rows


def dummy_tv_model_forward(x):
    """Forward pass of _DummyTVModel: returns x unchanged.

    Implemented as a tiled, input-aliased Pallas identity kernel.
    """
    n, c, h, w = x.shape
    total = n * c * h * w

    geom = _pick_geometry(total, x.dtype.itemsize)
    if geom is None:
        # Odd shape with no (8, 128)-friendly factorization: the identity is
        # still exact without a kernel.
        return x

    rows, cols, block_rows = geom
    x2d = x.reshape(rows, cols)

    out2d = pl.pallas_call(
        _identity_kernel,
        out_shape=jax.ShapeDtypeStruct((rows, cols), x2d.dtype),
        grid=(rows // block_rows,),
        in_specs=[pl.BlockSpec((block_rows, cols), lambda i: (i, 0))],
        out_specs=pl.BlockSpec((block_rows, cols), lambda i: (i, 0)),
        input_output_aliases={0: 0},  # donate input buffer -> alias, not copy
        compiler_params=pltpu.CompilerParams(
            dimension_semantics=("parallel",),  # shard copy across v7x's 2 TCs
            vmem_limit_bytes=32 * 1024 * 1024,  # safe on v5e/v6e/v7x
        ),
    )(x2d)

    return out2d.reshape(n, c, h, w)


def init_params(out_channels=21, in_channels=10):
    """Deterministic init of the (dead) classifier Conv2d(10, 21, 1) params.

    Mirrors the module's __init__ for fidelity only; forward() never uses them,
    so they are kept out of the traced forward path entirely.
    """
    key = jax.random.PRNGKey(42)
    kw, kb = jax.random.split(key)
    weight = jax.random.normal(kw, (out_channels, in_channels, 1, 1), jnp.float32) * 0.1
    bias = jax.random.normal(kb, (out_channels,), jnp.float32) * 0.01
    return {"classifier.0.weight": weight, "classifier.0.bias": bias}


if __name__ == "__main__":
    # NCHW input consistent with the module (conv expects 10 input channels).
    key = jax.random.PRNGKey(0)
    shape = (2, 10, 16, 16)
    x = jax.random.normal(key, shape, dtype=jnp.float32)

    y = dummy_tv_model_forward(x)
    y = jax.block_until_ready(y)

    # The input buffer may have been donated to the kernel, so verify against
    # a regenerated copy from the same PRNG key rather than touching `x`.
    x_expected = jax.random.normal(key, shape, dtype=jnp.float32)
    assert y.shape == shape and y.dtype == jnp.float32
    assert bool(jnp.array_equal(y, x_expected))
    print("KERNEL_OK")
</pallas_src>

<mosaic_0001>
module attributes {stable_mosaic.version = 11 : i64} {
  func.func @_identity_kernel(%arg0: i32, %arg1: memref<8x640xf32, #tpu.memory_space<vmem>>, %arg2: memref<8x640xf32, #tpu.memory_space<vmem>>) attributes {dimension_semantics = [#tpu.dimension_semantics<parallel>], iteration_bounds = array<i64: 1>, scalar_prefetch = 0 : i64, scratch_operands = 0 : i64, tpu.core_type = #tpu.core_type<tc>, window_params = [{transform_indices = @transform_0, window_bounds = array<i64: 8, 640>}, {transform_indices = @transform_1, window_bounds = array<i64: 8, 640>}]} {
    %c0 = arith.constant 0 : index
    %c0_0 = arith.constant 0 : index
    %0 = vector.load %arg1[%c0, %c0_0] : memref<8x640xf32, #tpu.memory_space<vmem>>, vector<8x640xf32>
    %c0_1 = arith.constant 0 : index
    %c0_2 = arith.constant 0 : index
    %1 = vector.load %arg2[%c0_1, %c0_2] : memref<8x640xf32, #tpu.memory_space<vmem>>, vector<8x640xf32>
    tpu.vector_store %arg2[%c0_1, %c0_2], %0 {strides = array<i32>} : memref<8x640xf32, #tpu.memory_space<vmem>>, vector<8x640xf32>,
    return
  }
  func.func @transform_0(%arg0: i32) -> (i32, i32) {
    %c0_i32 = arith.constant 0 : i32
    %c0_i32_0 = arith.constant 0 : i32
    return %arg0, %c0_i32 : i32, i32
  }
  func.func @transform_1(%arg0: i32) -> (i32, i32) {
    %c0_i32 = arith.constant 0 : i32
    %c0_i32_0 = arith.constant 0 : i32
    return %arg0, %c0_i32 : i32, i32
  }
}

</mosaic_0001>

<llo_original>
// kernel: tpu_custom_call.1
$region0: #{tpu_custom_call.1}
  #allocation0 [shape = 'u32[]', space=smem, size = 0x4, offset = 0x4, fixed_abs, tag = 'smem constant byte address 0x4 - core index']
  #allocation1 [shape = 'u32[144,128]{1,0:T(1,128)}', space=vmem, size = 0x12000, scoped, tag = 'internal scratch']
  %s0 = inlined_call_operand.hbm [shape: f32[8,640], index: 0, kind: input, shape index: {}, may-alias: {0,1}]
  %s1 = inlined_call_operand.hbm [shape: f32[8,640], index: 1, kind: output, shape index: {}, may-alias: {0,1}]
  %s2 = sld [smem:[#allocation0]]
  $region18: #{tpu_custom_call.1} parent=0
    _
  %s4 = ssub.s32 1, %s2
  %s5 = scalar_select 0, %s4, %s2
  $region1: #{tpu_custom_call.1} parent=0
    #allocation2 [shape = 'u8[20480]{0}', space=vmem, size = 0x5000, scoped, tag = 'input window, operand 0, single buffered']
    #allocation3 [shape = 's32[1]{0}', space=sflag, size = 0x4, scoped, tag = 'scoped memory for tpu_custom_call.1']
    #allocation4 [shape = 's32[1]{0}', space=sflag, size = 0x4, scoped, tag = 'scoped memory for tpu_custom_call.1']
    #allocation5 [shape = 'u8[20480]{0}', space=vmem, size = 0x5000, scoped, tag = 'output window, operand 0, single buffered']
    %6 = vsyncpa [#allocation3], 0
    %7 = vsyncpa [#allocation4], 0
    // Predicated region
    $region2: #{tpu_custom_call.1} parent=1 // pred_check
      _
    $region3: #{tpu_custom_call.1} parent=1 // pred_check_branch
      %9 = sbr.rel (0) target = $region5
    $region4: #{tpu_custom_call.1} parent=1 // pred_region
      %s11 = ssub.s32 640, 640
      %12 = vsyncadd [#allocation3], %s11
      %s14 = sshll.u32 [#allocation2], 4
      %s15 = int_to_ptr.vmem [resolvable:$true] %s14
      %17 = dma.hbm_to_vmem [thread:$0]  %s0, 640, %s15, [#allocation3]
    $region5: #{tpu_custom_call.1} parent=1 // pred_fallthru
      _
    // Predicated region
    $region6: #{tpu_custom_call.1} parent=1 // pred_check
      _
    $region7: #{tpu_custom_call.1} parent=1 // pred_check_branch
      %19 = sbr.rel (0) target = $region9
    $region8: #{tpu_custom_call.1} parent=1 // pred_region
      %20 = dma.done [#allocation3], 640
    $region9: #{tpu_custom_call.1} parent=1 // pred_fallthru
      _
    %v21 = vld [vmem:[#allocation2] sm:$0xff]
    %v22 = vld [vmem:[#allocation2 + $0x8] sm:$0xff]
    %v23 = vld [vmem:[#allocation2 + $0x10] sm:$0xff]
    %v24 = vld [vmem:[#allocation2 + $0x18] sm:$0xff]
    %v25 = vld [vmem:[#allocation2 + $0x20] sm:$0xff]
    %26 = vst [vmem:[#allocation5] sm:$0xff] %v21
    %27 = vst [vmem:[#allocation5 + $0x8] sm:$0xff] %v22
    %28 = vst [vmem:[#allocation5 + $0x10] sm:$0xff] %v23
    %29 = vst [vmem:[#allocation5 + $0x18] sm:$0xff] %v24
    %30 = vst [vmem:[#allocation5 + $0x20] sm:$0xff] %v25
    // Predicated region
    $region10: #{tpu_custom_call.1} parent=1 // pred_check
      _
    $region11: #{tpu_custom_call.1} parent=1 // pred_check_branch
      %32 = sbr.rel (0) target = $region13
    $region12: #{tpu_custom_call.1} parent=1 // pred_region
      %s34 = ssub.s32 640, 640
      %35 = vsyncadd [#allocation4], %s34
      %s37 = sshll.u32 [#allocation5], 4
      %s38 = int_to_ptr.vmem [resolvable:$true] %s37
      %40 = dma.vmem_to_hbm [thread:$0]  %s38, 640, %s1, [#allocation4]
    $region13: #{tpu_custom_call.1} parent=1 // pred_fallthru
      _
    // Predicated region
    $region14: #{tpu_custom_call.1} parent=1 // pred_check
      _
    $region15: #{tpu_custom_call.1} parent=1 // pred_check_branch
      %42 = sbr.rel (0) target = $region17
    $region16: #{tpu_custom_call.1} parent=1 // pred_region
      %43 = dma.done [#allocation4], 640
    $region17: #{tpu_custom_call.1} parent=1 // pred_fallthru
      _
    %44 = vsyncpa [#allocation3], 1
    %45 = vsyncpa [#allocation4], 1

</llo_original>
